<compile_context>
chip_gen: v7x
topology: tpu7x:2x2x1
jax: 0.10.0
libtpu: 0.0.40
codegen_flags: <defaults>
</compile_context>

<pallas_src>
import functools

import jax
import jax.numpy as jnp
from jax.experimental import pallas as pl
from jax.experimental.pallas import tpu as pltpu


def _ls_ce_kernel(logits_ref, tgt_ref, mask_ref, out_ref, *, eps, n_rows):
    """Per-row label-smoothed CE; each grid step writes its own (rt, 1) block."""
    i = pl.program_id(0)
    rt = out_ref.shape[0]

    x = logits_ref[...].astype(jnp.float32)            # (rt, V) f32 in-vreg cast
    V = x.shape[-1]

    # Numerically stable logsumexp (per row).
    m = jnp.max(x, axis=-1, keepdims=True)              # (rt, 1)
    lse = m + jnp.log(jnp.sum(jnp.exp(x - m), axis=-1, keepdims=True))

    # Fused smoothing term: sum_v w_v * x_v with w = eps/V + (1-eps)*onehot(tgt).
    lane = jax.lax.broadcasted_iota(jnp.int32, x.shape, 1)       # (rt, V)
    tgt = tgt_ref[...]                                           # (rt, 1) int32
    w = jnp.where(lane == tgt, 1.0 - eps + eps / V, eps / V)
    smooth = jnp.sum(w * x, axis=-1, keepdims=True)              # (rt, 1)

    loss = lse - smooth                                          # (rt, 1)

    # Mask: pad tokens (length mask) AND ragged-tail rows of the last block.
    # jnp.where (not multiply) so garbage/NaN reads in the ragged tail cannot
    # propagate into the result.
    row = i * rt + jax.lax.broadcasted_iota(jnp.int32, (rt, 1), 0)
    keep = jnp.logical_and(mask_ref[...] != 0.0, row < n_rows)
    out_ref[...] = jnp.where(keep, loss, 0.0)


def _pick_row_tile(n_rows, vocab, itemsize):
    """Largest row tile whose f32 working block is ~<= 4 MiB, sublane-aligned."""
    align = {4: 8, 2: 16, 1: 32}.get(itemsize, 8)       # f32 / bf16 / int8 packing
    budget = 4 * 1024 * 1024                            # f32 copy of one logits block
    rt = budget // (vocab * 4)
    rt = max(align, (rt // align) * align)
    rt = min(rt, 1024)
    rows_aligned = ((n_rows + align - 1) // align) * align
    return min(rt, rows_aligned)


def label_smoothed_ce(inputs, targets, lengths, eps=0.1, row_tile=None):
    """inputs (N,T,V), targets (N,T) int, lengths (N,) int -> scalar loss."""
    N, T, V = inputs.shape
    R = N * T

    logits = inputs.reshape(R, V)                       # keep native dtype
    tgt = targets.reshape(R, 1).astype(jnp.int32)
    valid = (jnp.arange(T)[None, :] < lengths[:, None]).reshape(R, 1)
    valid = valid.astype(jnp.float32)                   # tiny (R,1) array

    if row_tile is None:
        row_tile = _pick_row_tile(R, V, jnp.dtype(inputs.dtype).itemsize)
    num_tiles = pl.cdiv(R, row_tile)

    per_row = pl.pallas_call(
        functools.partial(_ls_ce_kernel, eps=eps, n_rows=R),
        out_shape=jax.ShapeDtypeStruct((num_tiles * row_tile, 1), jnp.float32),
        grid_spec=pltpu.PrefetchScalarGridSpec(
            num_scalar_prefetch=0,
            grid=(num_tiles,),
            in_specs=[
                pl.BlockSpec((row_tile, V), lambda i: (i, 0)),
                pl.BlockSpec((row_tile, 1), lambda i: (i, 0)),
                pl.BlockSpec((row_tile, 1), lambda i: (i, 0)),
            ],
            out_specs=pl.BlockSpec((row_tile, 1), lambda i: (i, 0)),
        ),
        compiler_params=pltpu.CompilerParams(
            dimension_semantics=("parallel",),          # disjoint output blocks -> megacore-safe
            vmem_limit_bytes=48 * 1024 * 1024,
        ),
    )(logits, tgt, valid)

    count = jnp.sum(lengths).astype(jnp.float32)
    return jnp.sum(per_row) / count


def _reference(inputs, targets, lengths, eps=0.1):
    """Pure-JAX reference matching the PyTorch module (reduct=True)."""
    N, T, V = inputs.shape
    logp = jax.nn.log_softmax(inputs.astype(jnp.float32), axis=-1)
    onehot = jax.nn.one_hot(targets, V, dtype=jnp.float32)
    tv = onehot * (1.0 - eps) + eps / V
    per_tok = -(tv * logp).sum(-1)                      # (N, T)
    mask = (jnp.arange(T)[None, :] < lengths[:, None]).astype(jnp.float32)
    return (per_tok * mask).sum() / jnp.sum(lengths).astype(jnp.float32)


if __name__ == "__main__":
    key = jax.random.PRNGKey(0)
    k1, k2 = jax.random.split(key)

    N, T, V = 2, 8, 64            # batch, pad_length, vocab_size
    inputs = jax.random.normal(k1, (N, T, V), dtype=jnp.float32)
    targets = jax.random.randint(k2, (N, T), 0, V, dtype=jnp.int32)
    lengths = jnp.array([8, 5], dtype=jnp.int32)

    loss = label_smoothed_ce(inputs, targets, lengths, eps=0.1)
    jax.block_until_ready(loss)

    ref = _reference(inputs, targets, lengths, eps=0.1)
    assert jnp.allclose(loss, ref, rtol=1e-5, atol=1e-5), (loss, ref)

    print("KERNEL_OK")
</pallas_src>

<mosaic_0001>
module attributes {stable_mosaic.version = 11 : i64} {
  func.func @_ls_ce_kernel(%arg0: i32, %arg1: memref<16x64xf32, #tpu.memory_space<vmem>>, %arg2: memref<16x1xi32, #tpu.memory_space<vmem>>, %arg3: memref<16x1xf32, #tpu.memory_space<vmem>>, %arg4: memref<16x1xf32, #tpu.memory_space<vmem>>) attributes {dimension_semantics = [#tpu.dimension_semantics<parallel>], iteration_bounds = array<i64: 1>, scalar_prefetch = 0 : i64, scratch_operands = 0 : i64, tpu.core_type = #tpu.core_type<tc>, window_params = [{transform_indices = @transform_0, window_bounds = array<i64: 16, 64>}, {transform_indices = @transform_1, window_bounds = array<i64: 16, 1>}, {transform_indices = @transform_2, window_bounds = array<i64: 16, 1>}, {transform_indices = @transform_3, window_bounds = array<i64: 16, 1>}]} {
    %c0 = arith.constant 0 : index
    %c0_0 = arith.constant 0 : index
    %0 = vector.load %arg1[%c0, %c0_0] : memref<16x64xf32, #tpu.memory_space<vmem>>, vector<16x64xf32>
    %cst = arith.constant dense<0xFF800000> : vector<16xf32>
    %1 = vector.multi_reduction <maximumf>, %0, %cst [1] : vector<16x64xf32> to vector<16xf32>
    %2 = vector.shape_cast %1 : vector<16xf32> to vector<16x1xf32>
    %3 = vector.broadcast %2 : vector<16x1xf32> to vector<16x64xf32>
    %4 = arith.subf %0, %3 : vector<16x64xf32>
    %5 = math.exp %4 : vector<16x64xf32>
    %cst_1 = arith.constant dense<0.000000e+00> : vector<16xf32>
    %6 = vector.multi_reduction <add>, %5, %cst_1 [1] : vector<16x64xf32> to vector<16xf32>
    %7 = vector.shape_cast %6 : vector<16xf32> to vector<16x1xf32>
    %8 = math.log %7 : vector<16x1xf32>
    %9 = arith.addf %2, %8 : vector<16x1xf32>
    %10 = tpu.iota {dimensions = array<i32: 1>} : vector<16x64xi32>
    %c0_2 = arith.constant 0 : index
    %c0_3 = arith.constant 0 : index
    %11 = vector.load %arg2[%c0_2, %c0_3] : memref<16x1xi32, #tpu.memory_space<vmem>>, vector<16x1xi32>
    %12 = vector.broadcast %11 : vector<16x1xi32> to vector<16x64xi32>
    %13 = arith.cmpi eq, %10, %12 : vector<16x64xi32>
    %cst_4 = arith.constant 0.901562511 : f32
    %cst_5 = arith.constant 1.562500e-03 : f32
    %14 = vector.broadcast %cst_4 : f32 to vector<16x64xf32>
    %15 = vector.broadcast %cst_5 : f32 to vector<16x64xf32>
    %16 = arith.select %13, %14, %15 : vector<16x64xi1>, vector<16x64xf32>
    %17 = arith.mulf %16, %0 : vector<16x64xf32>
    %cst_6 = arith.constant dense<0.000000e+00> : vector<16xf32>
    %18 = vector.multi_reduction <add>, %17, %cst_6 [1] : vector<16x64xf32> to vector<16xf32>
    %19 = vector.shape_cast %18 : vector<16xf32> to vector<16x1xf32>
    %20 = arith.subf %9, %19 : vector<16x1xf32>
    %c16_i32 = arith.constant 16 : i32
    %21 = arith.muli %arg0, %c16_i32 : i32
    %22 = tpu.iota {dimensions = array<i32: 0>} : vector<16x1xi32>
    %23 = vector.broadcast %21 : i32 to vector<16x1xi32>
    %24 = arith.addi %23, %22 : vector<16x1xi32>
    %c0_7 = arith.constant 0 : index
    %c0_8 = arith.constant 0 : index
    %25 = vector.load %arg3[%c0_7, %c0_8] : memref<16x1xf32, #tpu.memory_space<vmem>>, vector<16x1xf32>
    %cst_9 = arith.constant 0.000000e+00 : f32
    %26 = vector.broadcast %cst_9 : f32 to vector<16x1xf32>
    %27 = arith.cmpf one, %25, %26 : vector<16x1xf32>
    %c16_i32_10 = arith.constant 16 : i32
    %28 = vector.broadcast %c16_i32_10 : i32 to vector<16x1xi32>
    %29 = arith.cmpi slt, %24, %28 : vector<16x1xi32>
    %30 = arith.andi %27, %29 : vector<16x1xi1>
    %cst_11 = arith.constant 0.000000e+00 : f32
    %31 = vector.broadcast %cst_11 : f32 to vector<16x1xf32>
    %32 = arith.select %30, %20, %31 : vector<16x1xi1>, vector<16x1xf32>
    %c0_12 = arith.constant 0 : index
    %c0_13 = arith.constant 0 : index
    %33 = vector.load %arg4[%c0_12, %c0_13] : memref<16x1xf32, #tpu.memory_space<vmem>>, vector<16x1xf32>
    tpu.vector_store %arg4[%c0_12, %c0_13], %32 {strides = array<i32>} : memref<16x1xf32, #tpu.memory_space<vmem>>, vector<16x1xf32>,
    return
  }
  func.func @transform_0(%arg0: i32) -> (i32, i32) {
    %c0_i32 = arith.constant 0 : i32
    %c0_i32_0 = arith.constant 0 : i32
    return %arg0, %c0_i32 : i32, i32
  }
  func.func @transform_1(%arg0: i32) -> (i32, i32) {
    %c0_i32 = arith.constant 0 : i32
    %c0_i32_0 = arith.constant 0 : i32
    return %arg0, %c0_i32 : i32, i32
  }
  func.func @transform_2(%arg0: i32) -> (i32, i32) {
    %c0_i32 = arith.constant 0 : i32
    %c0_i32_0 = arith.constant 0 : i32
    return %arg0, %c0_i32 : i32, i32
  }
  func.func @transform_3(%arg0: i32) -> (i32, i32) {
    %c0_i32 = arith.constant 0 : i32
    %c0_i32_0 = arith.constant 0 : i32
    return %arg0, %c0_i32 : i32, i32
  }
}

</mosaic_0001>

<llo_original>
// kernel: tpu_custom_call.1
$region0: #{tpu_custom_call.1}
  #allocation0 [shape = 'u32[]', space=smem, size = 0x4, offset = 0x4, fixed_abs, tag = 'smem constant byte address 0x4 - core index']
  #allocation1 [shape = 'u32[144,128]{1,0:T(1,128)}', space=vmem, size = 0x12000, scoped, tag = 'internal scratch']
  %s0 = inlined_call_operand.vmem [shape: f32[16,64], index: 0, kind: input, shape index: {}]
  %s1 = inlined_call_operand.vmem [shape: s32[16,1], index: 1, kind: input, shape index: {}]
  %s2 = inlined_call_operand.vmem [shape: f32[16,1], index: 2, kind: input, shape index: {}]
  %s3 = inlined_call_operand.vmem [shape: f32[16,1], index: 3, kind: output, shape index: {}]
  %s4 = sld [smem:[#allocation0]]
  $region22: #{tpu_custom_call.1} parent=0
    _
  %s6 = ssub.s32 1, %s4
  %s7 = scalar_select 0, %s6, %s4
  // Predicated region
  $region2: #{tpu_custom_call.1} parent=0 // pred_check
    _
  $region3: #{tpu_custom_call.1} parent=0 // pred_check_branch
    %9 = sbr.rel (0) target = $region5
  $region4: #{tpu_custom_call.1} parent=0 // pred_region
    _
  $region5: #{tpu_custom_call.1} parent=0 // pred_fallthru
    _
  // Predicated region
  $region6: #{tpu_custom_call.1} parent=0 // pred_check
    _
  $region7: #{tpu_custom_call.1} parent=0 // pred_check_branch
    %11 = sbr.rel (0) target = $region9
  $region8: #{tpu_custom_call.1} parent=0 // pred_region
    _
  $region9: #{tpu_custom_call.1} parent=0 // pred_fallthru
    _
  // Predicated region
  $region10: #{tpu_custom_call.1} parent=0 // pred_check
    _
  $region11: #{tpu_custom_call.1} parent=0 // pred_check_branch
    %13 = sbr.rel (0) target = $region13
  $region12: #{tpu_custom_call.1} parent=0 // pred_region
    _
  $region13: #{tpu_custom_call.1} parent=0 // pred_fallthru
    _
  %v14 = vld [vmem:[%s0] sm:$0xff]
  %v15 = vld [vmem:[%s0 + $0x8] sm:$0xff]
  %vm16 = vcmask 523264
  %v17 = vsel %vm16, %v14, -inf
  %18 = vmax.xlane.f32.xlu0 %v17
  %v19 = vpop.xlane.xlu0 %18
  %v20 = vsel %vm16, %v15, -inf
  %21 = vmax.xlane.f32.xlu0 %v20
  %v22 = vpop.xlane.xlu0 %21
  %v23 = vsub.f32 %v14, %v19
  %v24 = vsub.f32 %v15, %v22
  %v25 = vmul.f32 %v23, 1.442695
  %v26 = vpow.pop %v25
  %v27 = vmul.f32 %v24, 1.442695
  %v28 = vpow.pop %v27
  %v29 = vsel %vm16, %v26, 0.0
  %30 = vadd.xlane.f32.xlu0 %v29
  %v31 = vpop.xlane.xlu0 %30
  %v32 = vsel %vm16, %v28, 0.0
  %33 = vadd.xlane.f32.xlu0 %v32
  %v34 = vpop.xlane.xlu0 %33
  %v35 = vlog2.pop %v31
  %v36 = vmul.f32 %v35, 0.6931472
  %v37 = vlog2.pop %v34
  %v38 = vmul.f32 %v37, 0.6931472
  %v39 = vadd.f32 %v19, %v36
  %v40 = vadd.f32 %v22, %v38
  %v41 = vlaneseq
  %v42 = vand.u32 %v41, 127
  %v43 = vld [vmem:[%s1] sm:$0xff]
  %v44 = vld [vmem:[%s1 + $0x8] sm:$0xff]
  %45 = vset.pattern.permute.xlu0 0
  %46 = vperm.xlu0 %45, %v43
  %v47 = vpop.permute.xlu0 %46
  %48 = vset.pattern.permute.xlu0 0
  %49 = vperm.xlu0 %48, %v44
  %v50 = vpop.permute.xlu0 %49
  %vm51 = vcmp.eq.s32.totalorder %v42, %v47
  %vm52 = vcmp.eq.s32.totalorder %v42, %v50
  %v53 = vsel %vm51, 0.9015625, 0.0015625
  %v54 = vsel %vm52, 0.9015625, 0.0015625
  %v55 = vmul.f32 %v53, %v14
  %v56 = vmul.f32 %v54, %v15
  %v57 = vsel %vm16, %v55, 0.0
  %58 = vadd.xlane.f32.xlu0 %v57
  %v59 = vpop.xlane.xlu0 %58
  %v60 = vsel %vm16, %v56, 0.0
  %61 = vadd.xlane.f32.xlu0 %v60
  %v62 = vpop.xlane.xlu0 %61
  %v63 = vsub.f32 %v39, %v59
  %v64 = vsub.f32 %v40, %v62
  %s65 = smul.u32 0, 16
  %v66 = vlaneseq
  %v67 = vshrl.u32 %v66, 7
  %v68 = vadd.s32 %v67, 8
  %v69 = vstv %s65
  %v70 = vadd.s32 %v69, %v67
  %v71 = vadd.s32 %v69, %v68
  %v72 = vld [vmem:[%s2] sm:$0xff]
  %v73 = vld [vmem:[%s2 + $0x8] sm:$0xff]
  %vm74 = vcmp.ne.f32.partialorder %v72, 0.0
  %vm75 = vcmp.ne.f32.partialorder %v73, 0.0
  %vm76 = vcmp.lt.s32.totalorder %v70, 16
  %vm77 = vcmp.lt.s32.totalorder %v71, 16
  %vm78 = vmand %vm74, %vm76
  %vm79 = vmand %vm75, %vm77
  %v80 = vsel %vm78, %v63, 0.0
  %v81 = vsel %vm79, %v64, 0.0
  %vm82 = vcmask 7168
  %83 = vst.msk [vmem:[%s3] sm:$0xff] %vm82, %v80
  %84 = vst.msk [vmem:[%s3 + $0x8] sm:$0xff] %vm82, %v81
  // Predicated region
  $region14: #{tpu_custom_call.1} parent=0 // pred_check
    _
  $region15: #{tpu_custom_call.1} parent=0 // pred_check_branch
    %86 = sbr.rel (0) target = $region17
  $region16: #{tpu_custom_call.1} parent=0 // pred_region
    _
  $region17: #{tpu_custom_call.1} parent=0 // pred_fallthru
    _
  // Predicated region
  $region18: #{tpu_custom_call.1} parent=0 // pred_check
    _
  $region19: #{tpu_custom_call.1} parent=0 // pred_check_branch
    %88 = sbr.rel (0) target = $region21
  $region20: #{tpu_custom_call.1} parent=0 // pred_region
    _
  $region21: #{tpu_custom_call.1} parent=0 // pred_fallthru
    _

</llo_original>
